<compile_context>
chip_gen: v6e
topology: v6e:2x2x1
jax: 0.10.0
libtpu: 0.0.40
codegen_flags: <defaults>
</compile_context>

<pallas_src>
import math
from functools import partial

import jax
import jax.numpy as jnp
from jax import lax
from jax.experimental import pallas as pl
from jax.experimental.pallas import tpu as pltpu

SIGMA = 0.3
EPS = 1e-8  # matches torch.nn.CosineSimilarity default eps
_LOG_NORM_CONST = math.log(SIGMA) + 0.5 * math.log(2.0 * math.pi)
_INV_TWO_VAR = 1.0 / (2.0 * SIGMA * SIGMA)
_NEG_FILL = -8.0  # cosine assigned to padded rows/cols; exp(log_prob(-8)) == 0 in f32

_FUSED_MAX_M = 2048                    # max padded M for the single-dot path
_FUSED_MAX_EY_BYTES = 8 * 1024 * 1024  # max resident (m_pad, D+2) bf16 block


def _log_prob(v):
    # Normal(loc=1, scale=SIGMA).log_prob(v)
    return -(v - 1.0) * (v - 1.0) * _INV_TWO_VAR - _LOG_NORM_CONST


def _round_up(a, b):
    return ((a + b - 1) // b) * b


def _vmem_limit_bytes():
    cap = 64 * 1024 * 1024
    try:
        cap = int(getattr(pltpu.get_tpu_info(), "vmem_capacity_bytes", cap))
    except Exception:
        pass
    # ~3/4 of physical VMEM, clamped to a sane range.
    return max(32 * 1024 * 1024, min((cap * 3) // 4, 96 * 1024 * 1024))


def _pick_tile_n(n, max_tile):
    if n <= 8:
        return 8
    # Prefer >= 2 row tiles so the second TensorCore (megacore / v7x) has work.
    return min(max_tile, _round_up((n + 1) // 2, 8))


def _normalize_augment(a, rows_pad, role, dtype):
    """L2-normalize rows (CosineSimilarity eps semantics), append two 'mask
    feature' columns so padded rows/cols yield cosines <= _NEG_FILL, then
    zero-pad rows to `rows_pad`.  Returned array is (rows_pad, D + 2) `dtype`.

    Feature layout (A = col D, B = col D+1):
      x rows:  valid -> (A=1, B=0)   padded -> (A=0, B=-8)
      y rows:  valid -> (A=0, B=1)   padded -> (A=-8, B=1)
    => valid/valid pairs are unchanged; any pair touching a padded row/col
       gets an extra -8 contribution, pushing it below the valid range.
    """
    n, d = a.shape
    af = a.astype(jnp.float32)
    ss = jnp.sum(af * af, axis=-1, keepdims=True)
    an = af * lax.rsqrt(jnp.maximum(ss, EPS * EPS))
    if role == "x":
        fa = jnp.ones((n, 1), jnp.float32)
        fb = jnp.zeros((n, 1), jnp.float32)
        pad_feats = jnp.array([0.0, _NEG_FILL], jnp.float32)
    else:
        fa = jnp.zeros((n, 1), jnp.float32)
        fb = jnp.ones((n, 1), jnp.float32)
        pad_feats = jnp.array([_NEG_FILL, 1.0], jnp.float32)
    aug = jnp.concatenate([an, fa, fb], axis=1)                  # (n, d + 2)
    out = jnp.zeros((rows_pad, d + 2), jnp.float32).at[:n, :].set(aug)
    if rows_pad > n:
        out = out.at[n:, d:].set(pad_feats)
    return out.astype(dtype)


# ----------------------------------------------------------------------------
# Fused kernel: whole (normalized, augmented) ey resident in VMEM, grid=(n_n,)
# ----------------------------------------------------------------------------
def _entropy_fused_kernel(xa_ref, ya_ref, *out_refs, want_right, want_left):
    # (tn, m_pad) cosine tile: contract last dims of both operands (no
    # explicit transpose), bf16 operands, f32 accumulation on the MXU.
    c = lax.dot_general(
        xa_ref[...], ya_ref[...],
        dimension_numbers=(((1,), (1,)), ((), ())),
        preferred_element_type=jnp.float32,
    )
    o = 0
    if want_right:
        rm = jnp.max(c, axis=-1, keepdims=True)        # (tn, 1) row maxes
        lp = _log_prob(rm)
        out_refs[o][...] = jnp.full(out_refs[o].shape,
                                    -jnp.sum(jnp.exp(lp) * lp),
                                    dtype=jnp.float32)
        o += 1
    if want_left:
        cm = jnp.max(c, axis=0, keepdims=True)          # (1, m_pad) col maxes
        out_refs[o][...] = jnp.broadcast_to(cm, out_refs[o].shape)


# ----------------------------------------------------------------------------
# Tiled fallback: 2-D grid (i parallel, j reduction) for very large M * D.
# ----------------------------------------------------------------------------
def _entropy_tiled_kernel(xa_ref, ya_ref, right_ref, colmax_ref, rowmax_scr, *,
                          n_m_tiles):
    j = pl.program_id(1)
    c = lax.dot_general(
        xa_ref[...], ya_ref[...],
        dimension_numbers=(((1,), (1,)), ((), ())),
        preferred_element_type=jnp.float32,
    )

    # Running row-max across the j reduction axis; fold the j == 0 init into a
    # single unconditional update (no per-step scf.if pair).
    tile_rm = jnp.max(c, axis=-1, keepdims=True)
    prev = jnp.where(j == 0, -jnp.inf, rowmax_scr[...])
    rowmax_scr[...] = jnp.maximum(prev, tile_rm)

    # Per-(i, j) partial column max, streamed to a lane-dense (8, tm) block.
    colmax_ref[...] = jnp.broadcast_to(jnp.max(c, axis=0, keepdims=True),
                                       colmax_ref.shape)

    @pl.when(j == n_m_tiles - 1)
    def _():
        rm = rowmax_scr[...]
        lp = _log_prob(rm)
        right_ref[...] = jnp.full(right_ref.shape,
                                  -jnp.sum(jnp.exp(lp) * lp),
                                  dtype=jnp.float32)


# ----------------------------------------------------------------------------
# Wrapper
# ----------------------------------------------------------------------------
def entropy_forward(ex, ey, condense_side="both", *, tile_n=512, tile_m=256,
                    mxu_dtype=jnp.bfloat16, force_tiled=False):
    """Pallas equivalent of entropy.forward.

    ex: (N, D), ey: (M, D).
    Returns a scalar for 'right'/'left', a tuple of two scalars for 'both'.
    """
    N, D = ex.shape
    M, Dy = ey.shape
    assert D == Dy
    want_right = condense_side in ("right", "both")
    want_left = condense_side in ("left", "both")
    assert want_right or want_left, f"bad condense_side: {condense_side}"

    D2 = D + 2
    itemsize = jnp.dtype(mxu_dtype).itemsize
    vmem_limit = _vmem_limit_bytes()

    m_pad_fused = _round_up(max(M, 1), 128)
    use_fused = (not force_tiled
                 and m_pad_fused <= _FUSED_MAX_M
                 and m_pad_fused * D2 * itemsize <= _FUSED_MAX_EY_BYTES)

    if use_fused:
        tn = _pick_tile_n(N, tile_n)
        n_pad = _round_up(N, tn)
        n_n = n_pad // tn
        m_pad = m_pad_fused

        xa = _normalize_augment(ex, n_pad, "x", mxu_dtype)
        ya = _normalize_augment(ey, m_pad, "y", mxu_dtype)

        out_shapes, out_specs = [], []
        if want_right:
            out_shapes.append(jax.ShapeDtypeStruct((n_n * 8, 128), jnp.float32))
            out_specs.append(pl.BlockSpec((8, 128), lambda i: (i, 0)))
        if want_left:
            out_shapes.append(jax.ShapeDtypeStruct((n_n * 8, m_pad), jnp.float32))
            out_specs.append(pl.BlockSpec((8, m_pad), lambda i: (i, 0)))

        cost = pl.CostEstimate(
            flops=int(2 * n_pad * m_pad * D2 + 4 * n_pad * m_pad),
            transcendentals=int(n_pad),
            bytes_accessed=int((n_pad + m_pad) * D2 * itemsize
                               + sum(int(s.shape[0]) * int(s.shape[1]) * 4
                                     for s in out_shapes)),
        )

        res = pl.pallas_call(
            partial(_entropy_fused_kernel,
                    want_right=want_right, want_left=want_left),
            out_shape=tuple(out_shapes),
            grid_spec=pltpu.PrefetchScalarGridSpec(
                num_scalar_prefetch=0,
                grid=(n_n,),
                in_specs=[
                    pl.BlockSpec((tn, D2), lambda i: (i, 0)),
                    pl.BlockSpec((m_pad, D2), lambda i: (0, 0)),  # resident ey
                ],
                out_specs=tuple(out_specs),
            ),
            compiler_params=pltpu.CompilerParams(
                dimension_semantics=("parallel",),
                vmem_limit_bytes=vmem_limit,
            ),
            cost_estimate=cost,
        )(xa, ya)
        if not isinstance(res, (tuple, list)):
            res = (res,)

        idx = 0
        ent_right = ent_left = None
        if want_right:
            ent_right = jnp.sum(res[idx].reshape(n_n, 8, 128)[:, 0, 0])
            idx += 1
        if want_left:
            cm = jnp.max(res[idx].reshape(n_n, 8, m_pad)[:, 0, :], axis=0)[:M]
            lp = _log_prob(cm)
            ent_left = -jnp.sum(jnp.exp(lp) * lp)
    else:
        # Tiled fallback (ey too large for a resident VMEM block).
        tn = _pick_tile_n(N, tile_n)
        tm = min(tile_m, _round_up(max(M, 1), 128))
        n_pad = _round_up(N, tn)
        m_pad = _round_up(M, tm)
        n_n, n_m = n_pad // tn, m_pad // tm

        xa = _normalize_augment(ex, n_pad, "x", mxu_dtype)
        ya = _normalize_augment(ey, m_pad, "y", mxu_dtype)

        cost = pl.CostEstimate(
            flops=int(2 * n_pad * m_pad * D2 + 4 * n_pad * m_pad),
            transcendentals=int(n_pad),
            bytes_accessed=int(n_pad * D2 * itemsize            # xa: once per i-tile
                               + n_n * m_pad * D2 * itemsize    # ya: re-read per i-tile
                               + n_n * 8 * 128 * 4
                               + n_n * 8 * m_pad * 4),
        )

        res = pl.pallas_call(
            partial(_entropy_tiled_kernel, n_m_tiles=n_m),
            out_shape=(
                jax.ShapeDtypeStruct((n_n * 8, 128), jnp.float32),
                jax.ShapeDtypeStruct((n_n * 8, m_pad), jnp.float32),
            ),
            grid_spec=pltpu.PrefetchScalarGridSpec(
                num_scalar_prefetch=0,
                grid=(n_n, n_m),
                in_specs=[
                    pl.BlockSpec((tn, D2), lambda i, j: (i, 0)),
                    pl.BlockSpec((tm, D2), lambda i, j: (j, 0)),
                ],
                out_specs=(
                    pl.BlockSpec((8, 128), lambda i, j: (i, 0)),
                    pl.BlockSpec((8, tm), lambda i, j: (i, j)),
                ),
                scratch_shapes=[pltpu.VMEM((tn, 1), jnp.float32)],
            ),
            compiler_params=pltpu.CompilerParams(
                dimension_semantics=("parallel", "arbitrary"),
                vmem_limit_bytes=vmem_limit,
            ),
            cost_estimate=cost,
        )(xa, ya)

        ent_right = jnp.sum(res[0].reshape(n_n, 8, 128)[:, 0, 0])
        cm = jnp.max(res[1].reshape(n_n, 8, m_pad)[:, 0, :], axis=0)[:M]
        lp = _log_prob(cm)
        ent_left = -jnp.sum(jnp.exp(lp) * lp)

    if condense_side == "right":
        return ent_right
    if condense_side == "left":
        return ent_left
    return ent_right, ent_left


# TODO(synk): `entropy.on_indexes` (index-gathered variant) is a separate
# method, not part of forward(); it is not implemented here.


def _reference(ex, ey):
    """Pure-JAX f32 reference for sanity checking."""
    x = ex.astype(jnp.float32)
    y = ey.astype(jnp.float32)
    xn = x / jnp.maximum(jnp.linalg.norm(x, axis=-1, keepdims=True), EPS)
    yn = y / jnp.maximum(jnp.linalg.norm(y, axis=-1, keepdims=True), EPS)
    c = xn @ yn.T
    c1 = _log_prob(jnp.max(c, axis=-1))
    c2 = _log_prob(jnp.max(c, axis=0))
    return -jnp.sum(jnp.exp(c1) * c1), -jnp.sum(jnp.exp(c2) * c2)


def _check(ex, ey, **kw):
    ent_r, ent_l = entropy_forward(ex, ey, condense_side="both", **kw)
    jax.block_until_ready((ent_r, ent_l))
    ref_r, ref_l = _reference(ex, ey)
    # bf16 MXU operands -> ~1e-3-level error on the entropy; 1e-2 tol is ample.
    assert jnp.allclose(ent_r, ref_r, atol=1e-2, rtol=1e-2), (ent_r, ref_r)
    assert jnp.allclose(ent_l, ref_l, atol=1e-2, rtol=1e-2), (ent_l, ref_l)


if __name__ == "__main__":
    key = jax.random.PRNGKey(0)
    k1, k2, k3, k4, k5, k6 = jax.random.split(key, 6)

    # Primary small case consistent with the module: seq=8, hidden=32.
    ex = jax.random.normal(k1, (8, 32), dtype=jnp.float32)
    ey = jax.random.normal(k2, (8, 32), dtype=jnp.float32)
    _check(ex, ey)

    # 'right' / 'left' specializations (only one output stream each).
    ref_r, ref_l = _reference(ex, ey)
    er = entropy_forward(ex, ey, condense_side="right")
    el = entropy_forward(ex, ey, condense_side="left")
    jax.block_until_ready((er, el))
    assert jnp.allclose(er, ref_r, atol=1e-2, rtol=1e-2), (er, ref_r)
    assert jnp.allclose(el, ref_l, atol=1e-2, rtol=1e-2), (el, ref_l)

    # Uneven sizes: exercises row/column padding via the augmented mask features.
    _check(jax.random.normal(k3, (12, 32), dtype=jnp.float32),
           jax.random.normal(k4, (20, 32), dtype=jnp.float32))

    # Multi-row-tile fused path (n_n >= 2, megacore-parallel), then the
    # tiled-M fallback path forced on the same problem.
    ex3 = jax.random.normal(k5, (384, 64), dtype=jnp.float32)
    ey3 = jax.random.normal(k6, (300, 64), dtype=jnp.float32)
    _check(ex3, ey3)
    _check(ex3, ey3, force_tiled=True)

    print("KERNEL_OK")
</pallas_src>

<mosaic_0001>
module attributes {stable_mosaic.version = 11 : i64} {
  func.func @_entropy_fused_kernel(%arg0: i32, %arg1: memref<8x34xbf16, #tpu.memory_space<vmem>>, %arg2: memref<128x34xbf16, #tpu.memory_space<vmem>>, %arg3: memref<8x128xf32, #tpu.memory_space<vmem>>, %arg4: memref<8x128xf32, #tpu.memory_space<vmem>>) attributes {dimension_semantics = [#tpu.dimension_semantics<parallel>], iteration_bounds = array<i64: 1>, scalar_prefetch = 0 : i64, scratch_operands = 0 : i64, tpu.core_type = #tpu.core_type<tc>, window_params = [{transform_indices = @transform_0, window_bounds = array<i64: 8, 34>}, {pipeline_mode = #tpu.pipeline_mode<synchronous>, transform_indices = @transform_1, window_bounds = array<i64: 128, 34>}, {transform_indices = @transform_2, window_bounds = array<i64: 8, 128>}, {transform_indices = @transform_3, window_bounds = array<i64: 8, 128>}]} {
    %c0 = arith.constant 0 : index
    %c0_0 = arith.constant 0 : index
    %0 = vector.load %arg1[%c0, %c0_0] : memref<8x34xbf16, #tpu.memory_space<vmem>>, vector<8x34xbf16>
    %c0_1 = arith.constant 0 : index
    %c0_2 = arith.constant 0 : index
    %1 = vector.load %arg2[%c0_1, %c0_2] : memref<128x34xbf16, #tpu.memory_space<vmem>>, vector<128x34xbf16>
    %cst = arith.constant dense<0.000000e+00> : vector<8x128xf32>
    %2 = tpu.matmul %0, %1, %cst {dimension_numbers = #tpu.dot_dimension_numbers<[1], [1], [0], [0], [0, 0, 1, 0], [], []>} : vector<8x34xbf16>, vector<128x34xbf16>, vector<8x128xf32> -> vector<8x128xf32>
    %cst_3 = arith.constant dense<0xFF800000> : vector<8xf32>
    %3 = vector.multi_reduction <maximumf>, %2, %cst_3 [1] : vector<8x128xf32> to vector<8xf32>
    %4 = vector.shape_cast %3 : vector<8xf32> to vector<8x1xf32>
    %cst_4 = arith.constant 1.000000e+00 : f32
    %5 = vector.broadcast %cst_4 : f32 to vector<8x1xf32>
    %6 = arith.subf %4, %5 : vector<8x1xf32>
    %cst_5 = arith.constant 0.000000e+00 : f32
    %7 = vector.broadcast %cst_5 : f32 to vector<8x1xf32>
    %8 = arith.subf %7, %6 : vector<8x1xf32>
    %cst_6 = arith.constant 1.000000e+00 : f32
    %9 = vector.broadcast %cst_6 : f32 to vector<8x1xf32>
    %10 = arith.subf %4, %9 : vector<8x1xf32>
    %11 = arith.mulf %8, %10 : vector<8x1xf32>
    %cst_7 = arith.constant 5.55555534 : f32
    %12 = vector.broadcast %cst_7 : f32 to vector<8x1xf32>
    %13 = arith.mulf %11, %12 : vector<8x1xf32>
    %cst_8 = arith.constant -0.285034269 : f32
    %14 = vector.broadcast %cst_8 : f32 to vector<8x1xf32>
    %15 = arith.subf %13, %14 : vector<8x1xf32>
    %16 = math.exp %15 : vector<8x1xf32>
    %17 = arith.mulf %16, %15 : vector<8x1xf32>
    %18 = vector.shape_cast %17 : vector<8x1xf32> to vector<1x8x1xf32>
    %cst_9 = arith.constant dense<0.000000e+00> : vector<1xf32>
    %19 = vector.multi_reduction <add>, %18, %cst_9 [1, 2] : vector<1x8x1xf32> to vector<1xf32>
    %20 = vector.shape_cast %19 : vector<1xf32> to vector<1x1x1xf32>
    %21 = vector.extract %20[0, 0, 0] : f32 from vector<1x1x1xf32>
    %cst_10 = arith.constant 0.000000e+00 : f32
    %22 = arith.subf %cst_10, %21 : f32
    %23 = vector.broadcast %22 : f32 to vector<8x128xf32>
    %c0_11 = arith.constant 0 : index
    %c0_12 = arith.constant 0 : index
    %24 = vector.load %arg3[%c0_11, %c0_12] : memref<8x128xf32, #tpu.memory_space<vmem>>, vector<8x128xf32>
    tpu.vector_store %arg3[%c0_11, %c0_12], %23 {strides = array<i32>} : memref<8x128xf32, #tpu.memory_space<vmem>>, vector<8x128xf32>,
    %cst_13 = arith.constant dense<0xFF800000> : vector<128xf32>
    %25 = vector.multi_reduction <maximumf>, %2, %cst_13 [0] : vector<8x128xf32> to vector<128xf32>
    %26 = vector.shape_cast %25 : vector<128xf32> to vector<1x128xf32>
    %27 = vector.shape_cast %26 : vector<1x128xf32> to vector<1x128xf32>
    %28 = vector.broadcast %27 : vector<1x128xf32> to vector<8x128xf32>
    %c0_14 = arith.constant 0 : index
    %c0_15 = arith.constant 0 : index
    %29 = vector.load %arg4[%c0_14, %c0_15] : memref<8x128xf32, #tpu.memory_space<vmem>>, vector<8x128xf32>
    tpu.vector_store %arg4[%c0_14, %c0_15], %28 {strides = array<i32>} : memref<8x128xf32, #tpu.memory_space<vmem>>, vector<8x128xf32>,
    return
  }
  func.func @transform_0(%arg0: i32) -> (i32, i32) {
    %c0_i32 = arith.constant 0 : i32
    %c0_i32_0 = arith.constant 0 : i32
    return %arg0, %c0_i32 : i32, i32
  }
  func.func @transform_1(%arg0: i32) -> (i32, i32) {
    %c0_i32 = arith.constant 0 : i32
    %c0_i32_0 = arith.constant 0 : i32
    %c0_i32_1 = arith.constant 0 : i32
    return %c0_i32, %c0_i32_0 : i32, i32
  }
  func.func @transform_2(%arg0: i32) -> (i32, i32) {
    %c0_i32 = arith.constant 0 : i32
    %c0_i32_0 = arith.constant 0 : i32
    return %arg0, %c0_i32 : i32, i32
  }
  func.func @transform_3(%arg0: i32) -> (i32, i32) {
    %c0_i32 = arith.constant 0 : i32
    %c0_i32_0 = arith.constant 0 : i32
    return %arg0, %c0_i32 : i32, i32
  }
}

</mosaic_0001>

<llo_original>
// kernel: tpu_custom_call.1
$region0: #{tpu_custom_call.1}
  #allocation0 [shape = 'u32[]', space=smem, size = 0x4, offset = 0x4, fixed_abs, tag = 'smem constant byte address 0x4 - core index']
  #allocation1 [shape = 'u32[144,128]{1,0:T(1,128)}', space=vmem, size = 0x12000, scoped, tag = 'internal scratch']
  %s0 = inlined_call_operand.vmem [shape: bf16[8,34], index: 0, kind: input, shape index: {}]
  %s1 = inlined_call_operand.vmem [shape: bf16[128,34], index: 1, kind: input, shape index: {}]
  %s2 = inlined_call_operand.hbm [shape: f32[8,128], index: 2, kind: output, shape index: {0}]
  %s3 = inlined_call_operand.hbm [shape: f32[8,128], index: 3, kind: output, shape index: {1}]
  %4 = xla_tuple %s2, %s3
  %s5 = sld [smem:[#allocation0]]
  $region26: #{tpu_custom_call.1} parent=0
    _
  %s7 = ssub.s32 1, %s5
  %s8 = scalar_select 0, %s7, %s5
  $region1: #{tpu_custom_call.1} parent=0
    #allocation2 [shape = 'u8[4096]{0}', space=vmem, size = 0x1000, scoped, tag = 'output window, operand 0, single buffered']
    #allocation3 [shape = 's32[1]{0}', space=sflag, size = 0x4, scoped, tag = 'scoped memory for tpu_custom_call.1']
    #allocation4 [shape = 'u8[4096]{0}', space=vmem, size = 0x1000, scoped, tag = 'output window, operand 1, single buffered']
    #allocation5 [shape = 's32[1]{0}', space=sflag, size = 0x4, scoped, tag = 'scoped memory for tpu_custom_call.1']
    %9 = vsyncpa [#allocation3], 0
    %10 = vsyncpa [#allocation5], 0
    // Predicated region
    $region2: #{tpu_custom_call.1} parent=1 // pred_check
      _
    $region3: #{tpu_custom_call.1} parent=1 // pred_check_branch
      %12 = sbr.rel (0) target = $region5
    $region4: #{tpu_custom_call.1} parent=1 // pred_region
      _
    $region5: #{tpu_custom_call.1} parent=1 // pred_fallthru
      _
    // Predicated region
    $region6: #{tpu_custom_call.1} parent=1 // pred_check
      _
    $region7: #{tpu_custom_call.1} parent=1 // pred_check_branch
      %14 = sbr.rel (0) target = $region9
    $region8: #{tpu_custom_call.1} parent=1 // pred_region
      _
    $region9: #{tpu_custom_call.1} parent=1 // pred_fallthru
      _
    %v16 = vld [vmem:[%s0] sm:$0xf]
    %v17 = vld [vmem:[%s1] sm:$0xf]
    %v18 = vld [vmem:[%s1 + $0x4] sm:$0xf]
    %v19 = vld [vmem:[%s1 + $0x8] sm:$0xf]
    %v20 = vld [vmem:[%s1 + $0xc] sm:$0xf]
    %v21 = vld [vmem:[%s1 + $0x10] sm:$0xf]
    %v22 = vld [vmem:[%s1 + $0x14] sm:$0xf]
    %v23 = vld [vmem:[%s1 + $0x18] sm:$0xf]
    %v24 = vld [vmem:[%s1 + $0x1c] sm:$0xf]
    %v25 = vld [vmem:[%s1 + $0x20] sm:$0xf]
    %v26 = vld [vmem:[%s1 + $0x24] sm:$0xf]
    %v27 = vld [vmem:[%s1 + $0x28] sm:$0xf]
    %v28 = vld [vmem:[%s1 + $0x2c] sm:$0xf]
    %v29 = vld [vmem:[%s1 + $0x30] sm:$0xf]
    %v30 = vld [vmem:[%s1 + $0x34] sm:$0xf]
    %v31 = vld [vmem:[%s1 + $0x38] sm:$0xf]
    %v32 = vld [vmem:[%s1 + $0x3c] sm:$0xf]
    %v49 = vunpack.c.l.b16 %v17
    %v50 = vunpack.c.l.b16 %v18
    %v51 = vunpack.c.l.b16 %v19
    %v52 = vunpack.c.l.b16 %v20
    %v53 = vunpack.c.l.b16 %v21
    %v54 = vunpack.c.l.b16 %v22
    %v55 = vunpack.c.l.b16 %v23
    %v56 = vunpack.c.l.b16 %v24
    %v57 = vunpack.c.l.b16 %v25
    %v58 = vunpack.c.l.b16 %v26
    %v59 = vunpack.c.l.b16 %v27
    %v60 = vunpack.c.l.b16 %v28
    %v61 = vunpack.c.l.b16 %v29
    %v62 = vunpack.c.l.b16 %v30
    %v63 = vunpack.c.l.b16 %v31
    %v64 = vunpack.c.l.b16 %v32
    %v65 = vpack.c.b16 %v50, %v49
    %v66 = vpack.c.b16 %v52, %v51
    %v67 = vpack.c.b16 %v54, %v53
    %v68 = vpack.c.b16 %v56, %v55
    %v69 = vpack.c.b16 %v58, %v57
    %v70 = vpack.c.b16 %v60, %v59
    %v71 = vpack.c.b16 %v62, %v61
    %v72 = vpack.c.b16 %v64, %v63
    %vm73 = vcmask 277504
    %v75 = vsel %vm73, %v16, 0
    %v78 = vsel %vm73, %v65, 0
    %v81 = vsel %vm73, %v66, 0
    %v84 = vsel %vm73, %v67, 0
    %v87 = vsel %vm73, %v68, 0
    %v90 = vsel %vm73, %v69, 0
    %v93 = vsel %vm73, %v70, 0
    %v96 = vsel %vm73, %v71, 0
    %v99 = vsel %vm73, %v72, 0
    %101 = vmatprep.subr.bf16.mxu0 0
    %102 = vmatpush1.bf16.xpose.msra.mxu0 %v99
    %103 = vmatprep.subr.bf16.mxu0 0
    %104 = vmatpush1.bf16.xpose.msra.mxu0 %v96
    %105 = vmatprep.subr.bf16.mxu0 0
    %106 = vmatpush1.bf16.xpose.msra.mxu0 %v93
    %107 = vmatprep.subr.bf16.mxu0 0
    %108 = vmatpush1.bf16.xpose.msra.mxu0 %v90
    %109 = vmatprep.subr.bf16.mxu0 0
    %110 = vmatpush1.bf16.xpose.msra.mxu0 %v87
    %111 = vmatprep.subr.bf16.mxu0 0
    %112 = vmatpush1.bf16.xpose.msra.mxu0 %v84
    %113 = vmatprep.subr.bf16.mxu0 0
    %114 = vmatpush1.bf16.xpose.msra.mxu0 %v81
    %115 = vmatprep.subr.bf16.mxu0 0
    %116 = vmatpush1.bf16.xpose.msra.mxu0 %v78
    %117 = vmatprep.subr.bf16.mxu0 0
    %118 = vmatpush2.bf16.xpose.msra.mxu0 0
    %119 = vmatprep.subr.bf16.mxu0 0
    %120 = vmatpush2.bf16.xpose.msra.mxu0 0
    %121 = vmatprep.subr.bf16.mxu0 0
    %122 = vmatpush2.bf16.xpose.msra.mxu0 0
    %123 = vmatprep.subr.bf16.mxu0 0
    %124 = vmatpush2.bf16.xpose.msra.mxu0 0
    %125 = vmatprep.subr.bf16.mxu0 0
    %126 = vmatpush2.bf16.xpose.msra.mxu0 0
    %127 = vmatprep.subr.bf16.mxu0 0
    %128 = vmatpush2.bf16.xpose.msra.mxu0 0
    %129 = vmatprep.subr.bf16.mxu0 0
    %130 = vmatpush2.bf16.xpose.msra.mxu0 0
    %131 = vmatprep.subr.bf16.mxu0 0
    %132 = vmatpush2.bf16.xpose.msra.mxu0 0
    %133 = vmatprep.mubr.bf16.mxu0 0
    %134 = vmatmul.mubr.bf16.gmra.mxu0 %v75
    %v135 = vpop.f32.mrf.mxu0
    %v136 = vadd.f32 0.0, %v135
    %v137 = vpop.f32.mrf.mxu0
    %v138 = vpop.f32.mrf.mxu0
    %v139 = vpop.f32.mrf.mxu0
    %140 = vdwg.mxu0
    %141 = vmax.xlane.f32.xlu0 %v136
    %v142 = vpop.xlane.xlu0 %141
    %v143 = vsub.f32 %v142, 1.0
    %v144 = vsub.f32 0.0, %v143
    %v145 = vmul.f32 %v144, %v143
    %v146 = vmul.f32 %v145, 5.5555553
    %v147 = vsub.f32 %v146, -0.28503427
    %v148 = vmul.f32 %v147, 1.442695
    %v149 = vpow.pop %v148
    %v150 = vmul.f32 %v149, %v147
    %vm151 = vcmask 7168
    %v152 = vsel %vm151, %v150, 0.0
    %153 = vadd.xlane.f32.xlu0 %v152
    %v154 = vpop.xlane.xlu0 %153
    %v155 = vrot.slane %v154, 4
    %v156 = vadd.f32 %v154, %v155
    %v157 = vrot.slane %v156, 2
    %v158 = vadd.f32 %v156, %v157
    %v159 = vrot.slane %v158, 1
    %v160 = vadd.f32 %v158, %v159
    %s161 = vtos %v160
    %s162 = ssub.f32 0.0, %s161
    %v163 = vstv %s162
    %164 = vst [vmem:[#allocation2] sm:$0xff] %v163
    %v165 = vrot.slane %v136, 4
    %v166 = vmax.f32 %v136, %v165
    %v167 = vrot.slane %v166, 2
    %v168 = vmax.f32 %v166, %v167
    %v169 = vrot.slane %v168, 1
    %v170 = vmax.f32 %v168, %v169
    %171 = vst [vmem:[#allocation4] sm:$0xff] %v170
    // Predicated region
    $region10: #{tpu_custom_call.1} parent=1 // pred_check
      _
    $region11: #{tpu_custom_call.1} parent=1 // pred_check_branch
      %173 = sbr.rel (0) target = $region13
    $region12: #{tpu_custom_call.1} parent=1 // pred_region
      %s175 = ssub.s32 128, 128
      %176 = vsyncadd [#allocation3], %s175
      %s178 = sshll.u32 [#allocation2], 4
      %s179 = int_to_ptr.vmem [resolvable:$true] %s178
      %181 = dma.vmem_to_hbm [thread:$0]  %s179, 128, %s2, [#allocation3]
    $region13: #{tpu_custom_call.1} parent=1 // pred_fallthru
      _
    // Predicated region
    $region14: #{tpu_custom_call.1} parent=1 // pred_check
      _
    $region15: #{tpu_custom_call.1} parent=1 // pred_check_branch
      %183 = sbr.rel (0) target = $region17
    $region16: #{tpu_custom_call.1} parent=1 // pred_region
      %s185 = ssub.s32 128, 128
      %186 = vsyncadd [#allocation5], %s185
      %s188 = sshll.u32 [#allocation4], 4
      %s189 = int_to_ptr.vmem [resolvable:$true] %s188
      %191 = dma.vmem_to_hbm [thread:$0]  %s189, 128, %s3, [#allocation5]
    $region17: #{tpu_custom_call.1} parent=1 // pred_fallthru
      _
    // Predicated region
    $region18: #{tpu_custom_call.1} parent=1 // pred_check
      _
    $region19: #{tpu_custom_call.1} parent=1 // pred_check_branch
      %193 = sbr.rel (0) target = $region21
    $region20: #{tpu_custom_call.1} parent=1 // pred_region
      %194 = dma.done [#allocation3], 128
    $region21: #{tpu_custom_call.1} parent=1 // pred_fallthru
      _
    // Predicated region
    $region22: #{tpu_custom_call.1} parent=1 // pred_check
      _
    $region23: #{tpu_custom_call.1} parent=1 // pred_check_branch
      %196 = sbr.rel (0) target = $region25
    $region24: #{tpu_custom_call.1} parent=1 // pred_region
      %197 = dma.done [#allocation5], 128
    $region25: #{tpu_custom_call.1} parent=1 // pred_fallthru
      _
    %198 = vsyncpa [#allocation3], 1
    %199 = vsyncpa [#allocation5], 1

</llo_original>
